<compile_context>
chip_gen: v6e
topology: v6e:2x2x1
jax: 0.10.0
libtpu: 0.0.40
codegen_flags: <defaults>
</compile_context>

<pallas_src>
import jax
import jax.numpy as jnp
from jax.experimental import pallas as pl
from jax.experimental.pallas import tpu as pltpu


def _round_up(x, m):
    return pl.cdiv(x, m) * m


def _tied_projection_kernel(emb_ref, w_ref, out_ref):
    # logits tile (TN, TV) = emb (TN, D) . W_tile (TV, D)^T; the transpose is
    # expressed via dimension_numbers so no XLU transpose / VMEM copy is made.
    out_ref[...] = jax.lax.dot_general(
        emb_ref[...], w_ref[...],
        dimension_numbers=(((1,), (1,)), ((), ())),
        preferred_element_type=jnp.float32,
    ).astype(out_ref.dtype)


def custom_transformer_forward(token_ids, weight, *,
                               token_tile=512, vocab_tile=1024,
                               compute_dtype=jnp.bfloat16,
                               out_dtype=jnp.float32):
    """token_ids: (B, S) ints; weight: (vocab, d_model). Returns (B, S, vocab) logits."""
    b, s = token_ids.shape
    vocab, d_model = weight.shape
    n = b * s

    # ---- tile sizing (multiples of 128; clamped for small problems) --------
    n128 = _round_up(n, 128)
    tn = min(token_tile, n128)
    if n128 // tn < 2 and n128 >= 256:
        # Keep at least 2 token tiles so both v7x TensorCores get work.
        tn = min(tn, _round_up(n128 // 2, 128))
    n_pad = _round_up(n, tn)

    v128 = _round_up(vocab, 128)
    if v128 <= 2 * vocab_tile:
        tv = v128          # whole vocab in one tile -> weight stays VMEM-resident
    else:
        tv = vocab_tile
    v_pad = _round_up(vocab, tv)

    nt = n_pad // tn
    nv = v_pad // tv

    # ---- coalesced embedding gather (per perf review) -----------------------
    # TODO(synk): torch nn.Embedding raises on out-of-range ids; jnp.take clips.
    w_c = weight.astype(compute_dtype)                     # single bf16 cast
    ids = token_ids.reshape(n).astype(jnp.int32)
    if n_pad != n:
        ids = jnp.pad(ids, (0, n_pad - n))                 # padded tokens -> row 0
    emb = jnp.take(w_c, ids, axis=0)                       # (n_pad, d_model)

    w_proj = w_c
    if v_pad != vocab:
        w_proj = jnp.pad(w_c, ((0, v_pad - vocab), (0, 0)))

    # ---- VMEM budget / cost hint --------------------------------------------
    cb = jnp.dtype(compute_dtype).itemsize
    ob = jnp.dtype(out_dtype).itemsize
    tile_vmem = 2 * (tn * d_model * cb + tv * d_model * cb + tn * tv * ob)
    vmem_limit = int(min(100 * 2**20, tile_vmem * 3 // 2 + (8 << 20)))

    flops = 2 * n_pad * d_model * v_pad
    bytes_accessed = (n_pad * d_model * cb                              # emb tiles
                      + (nt if nv > 1 else 1) * v_pad * d_model * cb    # weight stream
                      + n_pad * v_pad * ob)                             # logits

    out = pl.pallas_call(
        _tied_projection_kernel,
        out_shape=jax.ShapeDtypeStruct((n_pad, v_pad), out_dtype),
        grid_spec=pltpu.PrefetchScalarGridSpec(
            num_scalar_prefetch=0,
            grid=(nt, nv),
            in_specs=[
                # Gathered embedding rows: constant across the vocab axis, so
                # each (TN, D) tile is DMA'd once per token tile and reused.
                pl.BlockSpec((tn, d_model), lambda i, v: (i, 0)),
                # Tied weight, streamed by vocab tile (resident when nv == 1).
                pl.BlockSpec((tv, d_model), lambda i, v: (v, 0)),
            ],
            out_specs=pl.BlockSpec((tn, tv), lambda i, v: (i, v)),
        ),
        compiler_params=pltpu.CompilerParams(
            dimension_semantics=("parallel", "arbitrary"),
            vmem_limit_bytes=vmem_limit),
        cost_estimate=pl.CostEstimate(flops=flops, transcendentals=0,
                                      bytes_accessed=bytes_accessed),
    )(emb, w_proj)

    return out[:n, :vocab].reshape(b, s, vocab)


def reference_forward(token_ids, weight):
    embedded = jnp.take(weight, token_ids, axis=0)                     # (B, S, D)
    return jnp.einsum("bsd,vd->bsv", embedded, weight,
                      precision=jax.lax.Precision.HIGHEST)             # (B, S, V)


if __name__ == "__main__":
    # Small shapes consistent with the module's forward (vocab_size, d_model).
    batch, seq = 2, 128
    vocab_size, d_model = 256, 128

    key = jax.random.PRNGKey(0)
    k_w, k_ids = jax.random.split(key)

    # Deterministic synthetic parameters (nn.Embedding default init: N(0, 1)).
    weight = jax.random.normal(k_w, (vocab_size, d_model), dtype=jnp.float32)
    token_ids = jax.random.randint(k_ids, (batch, seq), 0, vocab_size,
                                   dtype=jnp.int32)

    fwd = jax.jit(custom_transformer_forward)
    out = jax.block_until_ready(fwd(token_ids, weight))

    ref = reference_forward(token_ids, weight)
    assert out.shape == (batch, seq, vocab_size)
    max_err = float(jnp.max(jnp.abs(out - ref)))
    # bf16 weights/activations with f32 accumulation (per perf review); the
    # looser tolerance vs. the f32 reference is expected numerics, not a bug.
    assert jnp.allclose(out, ref, atol=5e-1, rtol=5e-2), max_err

    print("KERNEL_OK")
</pallas_src>

<mosaic_0001>
module attributes {stable_mosaic.version = 11 : i64} {
  func.func @_tied_projection_kernel(%arg0: i32, %arg1: i32, %arg2: memref<128x128xbf16, #tpu.memory_space<vmem>>, %arg3: memref<256x128xbf16, #tpu.memory_space<vmem>>, %arg4: memref<128x256xf32, #tpu.memory_space<vmem>>) attributes {dimension_semantics = [#tpu.dimension_semantics<parallel>, #tpu.dimension_semantics<arbitrary>], iteration_bounds = array<i64: 2, 1>, scalar_prefetch = 0 : i64, scratch_operands = 0 : i64, tpu.core_type = #tpu.core_type<tc>, window_params = [{transform_indices = @transform_0, window_bounds = array<i64: 128, 128>}, {transform_indices = @transform_1, window_bounds = array<i64: 256, 128>}, {transform_indices = @transform_2, window_bounds = array<i64: 128, 256>}]} {
    %c0 = arith.constant 0 : index
    %c0_0 = arith.constant 0 : index
    %0 = vector.load %arg2[%c0, %c0_0] : memref<128x128xbf16, #tpu.memory_space<vmem>>, vector<128x128xbf16>
    %c0_1 = arith.constant 0 : index
    %c0_2 = arith.constant 0 : index
    %1 = vector.load %arg3[%c0_1, %c0_2] : memref<256x128xbf16, #tpu.memory_space<vmem>>, vector<256x128xbf16>
    %cst = arith.constant dense<0.000000e+00> : vector<128x256xf32>
    %2 = tpu.matmul %0, %1, %cst {dimension_numbers = #tpu.dot_dimension_numbers<[1], [1], [0], [0], [0, 0, 1, 0], [], []>} : vector<128x128xbf16>, vector<256x128xbf16>, vector<128x256xf32> -> vector<128x256xf32>
    %c0_3 = arith.constant 0 : index
    %c0_4 = arith.constant 0 : index
    %3 = vector.load %arg4[%c0_3, %c0_4] : memref<128x256xf32, #tpu.memory_space<vmem>>, vector<128x256xf32>
    tpu.vector_store %arg4[%c0_3, %c0_4], %2 {strides = array<i32>} : memref<128x256xf32, #tpu.memory_space<vmem>>, vector<128x256xf32>,
    return
  }
  func.func @transform_0(%arg0: i32, %arg1: i32) -> (i32, i32) {
    %c0_i32 = arith.constant 0 : i32
    %c0_i32_0 = arith.constant 0 : i32
    return %arg0, %c0_i32 : i32, i32
  }
  func.func @transform_1(%arg0: i32, %arg1: i32) -> (i32, i32) {
    %c0_i32 = arith.constant 0 : i32
    %c0_i32_0 = arith.constant 0 : i32
    return %arg1, %c0_i32 : i32, i32
  }
  func.func @transform_2(%arg0: i32, %arg1: i32) -> (i32, i32) {
    %c0_i32 = arith.constant 0 : i32
    return %arg0, %arg1 : i32, i32
  }
}

</mosaic_0001>

<llo_original>
// kernel: custom_transformer_forward.1
$region0: #{custom_transformer_forward.1}
  #allocation0 [shape = 'u32[]', space=smem, size = 0x4, offset = 0x4, fixed_abs, tag = 'smem constant byte address 0x4 - core index']
  #allocation1 [shape = 'u32[144,128]{1,0:T(1,128)}', space=vmem, size = 0x12000, scoped, tag = 'internal scratch']
  %s0 = inlined_call_operand.vmem [shape: bf16[256,128], index: 0, kind: input, shape index: {}]
  %s1 = inlined_call_operand.vmem [shape: bf16[256,128], index: 1, kind: input, shape index: {}]
  %s2 = inlined_call_operand.hbm [shape: f32[256,256], index: 2, kind: output, shape index: {}]
  %s3 = sld [smem:[#allocation0]]
  $region41: #{custom_transformer_forward.1} parent=0
    _
  %s5 = ssub.s32 1, %s3
  %s6 = scalar_select 0, %s5, %s3
  $region1: #{custom_transformer_forward.1} parent=0
    #allocation2 [shape = 'u8[262144]{0}', space=vmem, size = 0x40000, scoped, tag = 'output window, operand 0']
    #allocation3 [shape = 's32[2]{0}', space=sflag, size = 0x8, scoped, tag = 'scoped memory for custom_transformer_forward.1']
    %7 = vsyncpa [#allocation3], 0
    %s8 = scalar_lea.sflag [#allocation3], 1
    %9 = vsyncpa %s8, 0
    loop: start=0, step=1, limit=4
    $region2: #{custom_transformer_forward.1} parent=1 // loop_pre_header
      _
    $region3: #{custom_transformer_forward.1} parent=1 // loop_header
      %s11 = sphi 0, %s15
      %p12 = scmp.ge.s32.totalorder %s11, 4
      %s18 = sphi 0, %s30
      %s19 = sphi 0, %s26
      %s20 = sphi 0, %s18
      %s21 = sphi 0, %s19
      %s22 = sphi 0, %s20
      %s23 = sphi 0, %s21
      %s33 = sphi 0, %s35
      %s36 = sphi 0, %s33
      %s37 = sphi 0, %s36
      %s53 = sphi 0, %s37
      %s59 = sphi 0, %s61
      %s62 = sphi 0, %s59
      %s63 = sphi 0, %s62
      %s79 = sphi 0, %s63
      %s87 = sphi 0, %s89
      %s90 = sphi 0, %s87
      %s91 = sphi 0, %s90
      %s107 = sphi 0, %s91
    $region4: #{custom_transformer_forward.1} parent=1 // loop_header_branch
      %14 = sbr.rel (%p12) target = $region8
    $region5: #{custom_transformer_forward.1} parent=1 // loop_body
      %s16 = ssub.s32 %s11, 1
      %s17 = ssub.s32 %s11, 2
      %s24 = sadd.s32 1, %s19
      %p25 = scmp.ge.s32.totalorder %s24, 1
      %s26 = scalar_select %p25, 0, %s24
      %s27 = sadd.s32 1, %s18
      %s28 = scalar_select %p25, %s27, %s18
      %p29 = scmp.ge.s32.totalorder %s28, 2
      %s30 = scalar_select %p29, 0, %s28
      %s31 = ssub.s32 %s18, %s30
      %p32 = scmp.eq.s32.totalorder %s31, 0
      %s34 = sadd.s32 %s33, 1
      %s35 = scalar_select %p32, %s33, %s34
      %p38 = pneg %p32
      %p39 = scmp.eq.s32.totalorder %s11, 1
      %p40 = por %p38, %p39
      %p41 = scmp.ne.s32.totalorder %s33, %s36
      %p42 = scmp.eq.s32.totalorder %s11, 0
      %p43 = por %p41, %p42
      %p44 = scmp.ne.s32.totalorder %s33, %s36
      %p45 = scmp.eq.s32.totalorder %s16, 1
      %p46 = por %p44, %p45
      %p47 = scmp.ne.s32.totalorder %s36, %s37
      %p48 = scmp.eq.s32.totalorder %s16, 0
      %p49 = por %p47, %p48
      %p50 = scmp.ne.s32.totalorder %s36, %s37
      %p51 = scmp.eq.s32.totalorder %s17, 1
      %p52 = por %p50, %p51
      %p54 = scmp.ne.s32.totalorder %s37, %s53
      %p55 = scmp.eq.s32.totalorder %s17, 0
      %p56 = por %p54, %p55
      %s57 = ssub.s32 %s19, %s26
      %p58 = scmp.eq.s32.totalorder %s57, 0
      %s60 = sadd.s32 %s59, 1
      %s61 = scalar_select %p58, %s59, %s60
      %p64 = pneg %p58
      %p65 = scmp.eq.s32.totalorder %s11, 1
      %p66 = por %p64, %p65
      %p67 = scmp.ne.s32.totalorder %s59, %s62
      %p68 = scmp.eq.s32.totalorder %s11, 0
      %p69 = por %p67, %p68
      %p70 = scmp.ne.s32.totalorder %s59, %s62
      %p71 = scmp.eq.s32.totalorder %s16, 1
      %p72 = por %p70, %p71
      %p73 = scmp.ne.s32.totalorder %s62, %s63
      %p74 = scmp.eq.s32.totalorder %s16, 0
      %p75 = por %p73, %p74
      %p76 = scmp.ne.s32.totalorder %s62, %s63
      %p77 = scmp.eq.s32.totalorder %s17, 1
      %p78 = por %p76, %p77
      %p80 = scmp.ne.s32.totalorder %s63, %s79
      %p81 = scmp.eq.s32.totalorder %s17, 0
      %p82 = por %p80, %p81
      %s83 = ssub.s32 %s18, %s30
      %s84 = ssub.s32 %s19, %s26
      %s85 = sor.u32 %s83, %s84
      %p86 = scmp.eq.s32.totalorder %s85, 0
      %s88 = sadd.s32 %s87, 1
      %s89 = scalar_select %p86, %s87, %s88
      %p92 = pneg %p86
      %p93 = scmp.eq.s32.totalorder %s11, 1
      %p94 = por %p92, %p93
      %p95 = scmp.ne.s32.totalorder %s87, %s90
      %p96 = scmp.eq.s32.totalorder %s11, 0
      %p97 = por %p95, %p96
      %p98 = scmp.ne.s32.totalorder %s87, %s90
      %p99 = scmp.eq.s32.totalorder %s16, 1
      %p100 = por %p98, %p99
      %p101 = scmp.ne.s32.totalorder %s90, %s91
      %p102 = scmp.eq.s32.totalorder %s16, 0
      %p103 = por %p101, %p102
      %p104 = scmp.ne.s32.totalorder %s90, %s91
      %p105 = scmp.eq.s32.totalorder %s17, 1
      %p106 = por %p104, %p105
      %p108 = scmp.ne.s32.totalorder %s91, %s107
      %p109 = scmp.eq.s32.totalorder %s17, 0
      %p110 = por %p108, %p109
      %p111 = scmp.le.s32.totalorder 1, %s11
      %p112 = scmp.lt.s32.totalorder %s11, 3
      %p113 = pnand %p111, %p112
      %p114 = pneg %p113
      // Predicated region
      $region9: #{custom_transformer_forward.1} parent=5 // pred_check
        _
      $region10: #{custom_transformer_forward.1} parent=5 // pred_check_branch
        %116 = sbr.rel (%p113) target = $region12
      $region11: #{custom_transformer_forward.1} parent=5 // pred_region
        %s117 = ssub.s32 %s11, 1
        // Predicated region
        $region13: #{custom_transformer_forward.1} parent=11 // pred_check
          %p118 = pneg %p75
        $region14: #{custom_transformer_forward.1} parent=11 // pred_check_branch
          %120 = sbr.rel (%p118) target = $region16
        $region15: #{custom_transformer_forward.1} parent=11 // pred_region
          %s121 = smul.u32 32, %s21
          %p122 = scmp.lt.s32.totalorder %s121, 31
          %s123 = scalar_select %p122, %s121, 31
          %s124 = smul.addr %s123, 4
          %s125 = scalar_lea.vmem %s1, %s124
          %s126 = smul.u32 32, %s21
        $region16: #{custom_transformer_forward.1} parent=11 // pred_fallthru
          _
      $region12: #{custom_transformer_forward.1} parent=5 // pred_fallthru
        _
      %p127 = scmp.lt.s32.totalorder %s11, 2
      // Predicated region
      $region17: #{custom_transformer_forward.1} parent=5 // pred_check
        %p128 = pneg %p127
      $region18: #{custom_transformer_forward.1} parent=5 // pred_check_branch
        %130 = sbr.rel (%p128) target = $region20
      $region19: #{custom_transformer_forward.1} parent=5 // pred_region
        // Predicated region
        $region21: #{custom_transformer_forward.1} parent=19 // pred_check
          %p131 = pneg %p43
        $region22: #{custom_transformer_forward.1} parent=19 // pred_check_branch
          %133 = sbr.rel (%p131) target = $region24
        $region23: #{custom_transformer_forward.1} parent=19 // pred_region
          %s134 = smul.u32 16, %s18
          %p135 = scmp.lt.s32.totalorder %s134, 31
          %s136 = scalar_select %p135, %s134, 31
          %s137 = smul.addr %s136, 4
          %s138 = scalar_lea.vmem %s0, %s137
          %s139 = smul.u32 16, %s18
        $region24: #{custom_transformer_forward.1} parent=19 // pred_fallthru
          _
      $region20: #{custom_transformer_forward.1} parent=5 // pred_fallthru
        _
      %p140 = scmp.le.s32.totalorder 1, %s11
      %p141 = scmp.lt.s32.totalorder %s11, 3
      %p142 = pnand %p140, %p141
      %p143 = pneg %p142
      // Predicated region
      $region25: #{custom_transformer_forward.1} parent=5 // pred_check
        _
      $region26: #{custom_transformer_forward.1} parent=5 // pred_check_branch
        %145 = sbr.rel (%p142) target = $region28
      $region27: #{custom_transformer_forward.1} parent=5 // pred_region
        %s146 = ssub.s32 %s11, 1
        %s147 = smul.u32 16, %s20
        %p148 = scmp.lt.s32.totalorder %s147, 31
        %s149 = scalar_select %p148, %s147, 31
        %s150 = smul.addr %s149, 4
        %s151 = scalar_lea.vmem %s0, %s150
        %p152 = pneg %p49
        %p153 = pneg %p46
        %s154 = smul.u32 32, %s21
        %p155 = scmp.lt.s32.totalorder %s154, 31
        %s156 = scalar_select %p155, %s154, 31
        %s157 = smul.addr %s156, 4
        %s158 = scalar_lea.vmem %s1, %s157
        %p159 = pneg %p75
        %p160 = pneg %p72
        %p161 = pneg %p103
        %p162 = pneg %p100
        %s163 = sand.u32 %s90, 1
        %s164 = scalar_lea.sflag [#allocation3], %s163
        %s165 = sand.u32 %s90, 1
        %s166 = smul.addr %s165, 256
        %s167 = scalar_lea.vmem [#allocation2], %s166
        %s168 = smul.u32 16, %s20
        %p169 = scmp.lt.s32.totalorder %s168, 31
        %s170 = scalar_select %p169, %s168, 31
        %s171 = smul.addr %s170, 4
        %s172 = scalar_lea.vmem %s0, %s171
        %s173 = smul.u32 16, %s20
        %s174 = smul.u32 32, %s21
        %p175 = scmp.lt.s32.totalorder %s174, 31
        %s176 = scalar_select %p175, %s174, 31
        %s177 = smul.addr %s176, 4
        %s178 = scalar_lea.vmem %s1, %s177
        %s179 = smul.u32 32, %s21
        %s180 = smul.u32 16, %s20
        %s181 = smul.u32 2, %s21
        %v183 = vld [vmem:[%s172] sm:$0xf]
        %v184 = vld [vmem:[%s172 + $0x4] sm:$0xf]
        %v185 = vld [vmem:[%s172 + $0x8] sm:$0xf]
        %v186 = vld [vmem:[%s172 + $0xc] sm:$0xf]
        %v187 = vld [vmem:[%s172 + $0x10] sm:$0xf]
        %v188 = vld [vmem:[%s172 + $0x14] sm:$0xf]
        %v189 = vld [vmem:[%s172 + $0x18] sm:$0xf]
        %v190 = vld [vmem:[%s172 + $0x1c] sm:$0xf]
        %v191 = vld [vmem:[%s172 + $0x20] sm:$0xf]
        %v192 = vld [vmem:[%s172 + $0x24] sm:$0xf]
        %v193 = vld [vmem:[%s172 + $0x28] sm:$0xf]
        %v194 = vld [vmem:[%s172 + $0x2c] sm:$0xf]
        %v195 = vld [vmem:[%s172 + $0x30] sm:$0xf]
        %v196 = vld [vmem:[%s172 + $0x34] sm:$0xf]
        %v197 = vld [vmem:[%s172 + $0x38] sm:$0xf]
        %v198 = vld [vmem:[%s172 + $0x3c] sm:$0xf]
        %v199 = vld [vmem:[%s178] sm:$0xf]
        %v200 = vld [vmem:[%s178 + $0x4] sm:$0xf]
        %v201 = vld [vmem:[%s178 + $0x8] sm:$0xf]
        %v202 = vld [vmem:[%s178 + $0xc] sm:$0xf]
        %v203 = vld [vmem:[%s178 + $0x10] sm:$0xf]
        %v204 = vld [vmem:[%s178 + $0x14] sm:$0xf]
        %v205 = vld [vmem:[%s178 + $0x18] sm:$0xf]
        %v206 = vld [vmem:[%s178 + $0x1c] sm:$0xf]
        %v207 = vld [vmem:[%s178 + $0x20] sm:$0xf]
        %v208 = vld [vmem:[%s178 + $0x24] sm:$0xf]
        %v209 = vld [vmem:[%s178 + $0x28] sm:$0xf]
        %v210 = vld [vmem:[%s178 + $0x2c] sm:$0xf]
        %v211 = vld [vmem:[%s178 + $0x30] sm:$0xf]
        %v212 = vld [vmem:[%s178 + $0x34] sm:$0xf]
        %v213 = vld [vmem:[%s178 + $0x38] sm:$0xf]
        %v214 = vld [vmem:[%s178 + $0x3c] sm:$0xf]
        %v215 = vld [vmem:[%s178 + $0x40] sm:$0xf]
        %v216 = vld [vmem:[%s178 + $0x44] sm:$0xf]
        %v217 = vld [vmem:[%s178 + $0x48] sm:$0xf]
        %v218 = vld [vmem:[%s178 + $0x4c] sm:$0xf]
        %v219 = vld [vmem:[%s178 + $0x50] sm:$0xf]
        %v220 = vld [vmem:[%s178 + $0x54] sm:$0xf]
        %v221 = vld [vmem:[%s178 + $0x58] sm:$0xf]
        %v222 = vld [vmem:[%s178 + $0x5c] sm:$0xf]
        %v223 = vld [vmem:[%s178 + $0x60] sm:$0xf]
        %v224 = vld [vmem:[%s178 + $0x64] sm:$0xf]
        %v225 = vld [vmem:[%s178 + $0x68] sm:$0xf]
        %v226 = vld [vmem:[%s178 + $0x6c] sm:$0xf]
        %v227 = vld [vmem:[%s178 + $0x70] sm:$0xf]
        %v228 = vld [vmem:[%s178 + $0x74] sm:$0xf]
        %v229 = vld [vmem:[%s178 + $0x78] sm:$0xf]
        %v230 = vld [vmem:[%s178 + $0x7c] sm:$0xf]
        %v247 = vunpack.c.l.b16 %v183
        %v248 = vunpack.c.l.b16 %v184
        %v249 = vunpack.c.l.b16 %v185
        %v250 = vunpack.c.l.b16 %v186
        %v251 = vunpack.c.l.b16 %v187
        %v252 = vunpack.c.l.b16 %v188
        %v253 = vunpack.c.l.b16 %v189
        %v254 = vunpack.c.l.b16 %v190
        %v255 = vunpack.c.l.b16 %v191
        %v256 = vunpack.c.l.b16 %v192
        %v257 = vunpack.c.l.b16 %v193
        %v258 = vunpack.c.l.b16 %v194
        %v259 = vunpack.c.l.b16 %v195
        %v260 = vunpack.c.l.b16 %v196
        %v261 = vunpack.c.l.b16 %v197
        %v262 = vunpack.c.l.b16 %v198
        %v263 = vpack.c.b16 %v248, %v247
        %v264 = vpack.c.b16 %v250, %v249
        %v265 = vpack.c.b16 %v252, %v251
        %v266 = vpack.c.b16 %v254, %v253
        %v267 = vpack.c.b16 %v256, %v255
        %v268 = vpack.c.b16 %v258, %v257
        %v269 = vpack.c.b16 %v260, %v259
        %v270 = vpack.c.b16 %v262, %v261
        %v311 = vunpack.c.l.b16 %v199
        %v312 = vunpack.c.l.b16 %v200
        %v313 = vunpack.c.l.b16 %v201
        %v314 = vunpack.c.l.b16 %v202
        %v315 = vunpack.c.l.b16 %v203
        %v316 = vunpack.c.l.b16 %v204
        %v317 = vunpack.c.l.b16 %v205
        %v318 = vunpack.c.l.b16 %v206
        %v319 = vunpack.c.l.b16 %v207
        %v320 = vunpack.c.l.b16 %v208
        %v321 = vunpack.c.l.b16 %v209
        %v322 = vunpack.c.l.b16 %v210
        %v323 = vunpack.c.l.b16 %v211
        %v324 = vunpack.c.l.b16 %v212
        %v325 = vunpack.c.l.b16 %v213
        %v326 = vunpack.c.l.b16 %v214
        %v327 = vunpack.c.l.b16 %v215
        %v328 = vunpack.c.l.b16 %v216
        %v329 = vunpack.c.l.b16 %v217
        %v330 = vunpack.c.l.b16 %v218
        %v331 = vunpack.c.l.b16 %v219
        %v332 = vunpack.c.l.b16 %v220
        %v333 = vunpack.c.l.b16 %v221
        %v334 = vunpack.c.l.b16 %v222
        %v335 = vunpack.c.l.b16 %v223
        %v336 = vunpack.c.l.b16 %v224
        %v337 = vunpack.c.l.b16 %v225
        %v338 = vunpack.c.l.b16 %v226
        %v339 = vunpack.c.l.b16 %v227
        %v340 = vunpack.c.l.b16 %v228
        %v341 = vunpack.c.l.b16 %v229
        %v342 = vunpack.c.l.b16 %v230
        %v343 = vpack.c.b16 %v312, %v311
        %v344 = vpack.c.b16 %v314, %v313
        %v345 = vpack.c.b16 %v316, %v315
        %v346 = vpack.c.b16 %v318, %v317
        %v347 = vpack.c.b16 %v320, %v319
        %v348 = vpack.c.b16 %v322, %v321
        %v349 = vpack.c.b16 %v324, %v323
        %v350 = vpack.c.b16 %v326, %v325
        %v351 = vpack.c.b16 %v328, %v327
        %v352 = vpack.c.b16 %v330, %v329
        %v353 = vpack.c.b16 %v332, %v331
        %v354 = vpack.c.b16 %v334, %v333
        %v355 = vpack.c.b16 %v336, %v335
        %v356 = vpack.c.b16 %v338, %v337
        %v357 = vpack.c.b16 %v340, %v339
        %v358 = vpack.c.b16 %v342, %v341
        %375 = vmatprep.subr.bf16.mxu0 0
        %376 = vmatpush1.bf16.xpose.msra.mxu0 %v350
        %377 = vmatprep.subr.bf16.mxu0 0
        %378 = vmatpush1.bf16.xpose.msra.mxu0 %v349
        %379 = vmatprep.subr.bf16.mxu0 0
        %380 = vmatpush1.bf16.xpose.msra.mxu0 %v348
        %381 = vmatprep.subr.bf16.mxu0 0
        %382 = vmatpush1.bf16.xpose.msra.mxu0 %v347
        %383 = vmatprep.subr.bf16.mxu0 0
        %384 = vmatpush1.bf16.xpose.msra.mxu0 %v346
        %385 = vmatprep.subr.bf16.mxu0 0
        %386 = vmatpush1.bf16.xpose.msra.mxu0 %v345
        %387 = vmatprep.subr.bf16.mxu0 0
        %388 = vmatpush1.bf16.xpose.msra.mxu0 %v344
        %389 = vmatprep.subr.bf16.mxu0 0
        %390 = vmatpush1.bf16.xpose.msra.mxu0 %v343
        %391 = vmatprep.subr.bf16.mxu0 0
        %392 = vmatpush2.bf16.xpose.msra.mxu0 %v358
        %393 = vmatprep.subr.bf16.mxu0 0
        %394 = vmatpush2.bf16.xpose.msra.mxu0 %v357
        %395 = vmatprep.subr.bf16.mxu0 0
        %396 = vmatpush2.bf16.xpose.msra.mxu0 %v356
        %397 = vmatprep.subr.bf16.mxu0 0
        %398 = vmatpush2.bf16.xpose.msra.mxu0 %v355
        %399 = vmatprep.subr.bf16.mxu0 0
        %400 = vmatpush2.bf16.xpose.msra.mxu0 %v354
        %401 = vmatprep.subr.bf16.mxu0 0
        %402 = vmatpush2.bf16.xpose.msra.mxu0 %v353
        %403 = vmatprep.subr.bf16.mxu0 0
        %404 = vmatpush2.bf16.xpose.msra.mxu0 %v352
        %405 = vmatprep.subr.bf16.mxu0 0
        %406 = vmatpush2.bf16.xpose.msra.mxu0 %v351
        %407 = vmatprep.mubr.bf16.mxu0 0
        %408 = vmatmul.mubr.bf16.gmra.mxu0 %v263
        %v409 = vpop.f32.mrf.mxu0
        %v410 = vadd.f32 0.0, %v409
        %v411 = vpop.f32.mrf.mxu0
        %v412 = vadd.f32 0.0, %v411
        %v413 = vpop.f32.mrf.mxu0
        %v414 = vadd.f32 0.0, %v413
        %v415 = vpop.f32.mrf.mxu0
        %v416 = vadd.f32 0.0, %v415
        %417 = vmatprep.mubr.bf16.mxu0 0
        %418 = vmatmul.mubr.bf16.gmra.mxu0 %v264
        %v419 = vpop.f32.mrf.mxu0
        %v420 = vadd.f32 0.0, %v419
        %v421 = vpop.f32.mrf.mxu0
        %v422 = vadd.f32 0.0, %v421
        %v423 = vpop.f32.mrf.mxu0
        %v424 = vadd.f32 0.0, %v423
        %v425 = vpop.f32.mrf.mxu0
        %v426 = vadd.f32 0.0, %v425
        %427 = vmatprep.mubr.bf16.mxu0 0
        %428 = vmatmul.mubr.bf16.gmra.mxu0 %v265
        %v429 = vpop.f32.mrf.mxu0
        %v430 = vadd.f32 0.0, %v429
        %v431 = vpop.f32.mrf.mxu0
        %v432 = vadd.f32 0.0, %v431
        %v433 = vpop.f32.mrf.mxu0
        %v434 = vadd.f32 0.0, %v433
        %v435 = vpop.f32.mrf.mxu0
        %v436 = vadd.f32 0.0, %v435
        %437 = vmatprep.mubr.bf16.mxu0 0
        %438 = vmatmul.mubr.bf16.gmra.mxu0 %v266
        %v439 = vpop.f32.mrf.mxu0
        %v440 = vadd.f32 0.0, %v439
        %v441 = vpop.f32.mrf.mxu0
        %v442 = vadd.f32 0.0, %v441
        %v443 = vpop.f32.mrf.mxu0
        %v444 = vadd.f32 0.0, %v443
        %v445 = vpop.f32.mrf.mxu0
        %v446 = vadd.f32 0.0, %v445
        %447 = vmatprep.mubr.bf16.mxu0 0
        %448 = vmatmul.mubr.bf16.gmra.mxu0 %v267
        %v449 = vpop.f32.mrf.mxu0
        %v450 = vadd.f32 0.0, %v449
        %v451 = vpop.f32.mrf.mxu0
        %v452 = vadd.f32 0.0, %v451
        %v453 = vpop.f32.mrf.mxu0
        %v454 = vadd.f32 0.0, %v453
        %v455 = vpop.f32.mrf.mxu0
        %v456 = vadd.f32 0.0, %v455
        %457 = vmatprep.mubr.bf16.mxu0 0
        %458 = vmatmul.mubr.bf16.gmra.mxu0 %v268
        %v459 = vpop.f32.mrf.mxu0
        %v460 = vadd.f32 0.0, %v459
        %v461 = vpop.f32.mrf.mxu0
        %v462 = vadd.f32 0.0, %v461
        %v463 = vpop.f32.mrf.mxu0
        %v464 = vadd.f32 0.0, %v463
        %v465 = vpop.f32.mrf.mxu0
        %v466 = vadd.f32 0.0, %v465
        %467 = vmatprep.mubr.bf16.mxu0 0
        %468 = vmatmul.mubr.bf16.gmra.mxu0 %v269
        %v469 = vpop.f32.mrf.mxu0
        %v470 = vadd.f32 0.0, %v469
        %v471 = vpop.f32.mrf.mxu0
        %v472 = vadd.f32 0.0, %v471
        %v473 = vpop.f32.mrf.mxu0
        %v474 = vadd.f32 0.0, %v473
        %v475 = vpop.f32.mrf.mxu0
        %v476 = vadd.f32 0.0, %v475
        %477 = vmatprep.mubr.bf16.mxu0 0
        %478 = vmatmul.mubr.bf16.gmra.mxu0 %v270
        %v479 = vpop.f32.mrf.mxu0
        %v480 = vadd.f32 0.0, %v479
        %v481 = vpop.f32.mrf.mxu0
        %v482 = vadd.f32 0.0, %v481
        %v483 = vpop.f32.mrf.mxu0
        %v484 = vadd.f32 0.0, %v483
        %v485 = vpop.f32.mrf.mxu0
        %v486 = vadd.f32 0.0, %v485
        %487 = vdwg.mxu0
        %488 = vst [vmem:[%s167] sm:$0xff] %v410
        %489 = vst [vmem:[%s167 + $0x8] sm:$0xff] %v412
        %490 = vst [vmem:[%s167 + $0x10] sm:$0xff] %v414
        %491 = vst [vmem:[%s167 + $0x18] sm:$0xff] %v416
        %492 = vst [vmem:[%s167 + $0x20] sm:$0xff] %v420
        %493 = vst [vmem:[%s167 + $0x28] sm:$0xff] %v422
        %494 = vst [vmem:[%s167 + $0x30] sm:$0xff] %v424
        %495 = vst [vmem:[%s167 + $0x38] sm:$0xff] %v426
        %496 = vst [vmem:[%s167 + $0x40] sm:$0xff] %v430
        %497 = vst [vmem:[%s167 + $0x48] sm:$0xff] %v432
        %498 = vst [vmem:[%s167 + $0x50] sm:$0xff] %v434
        %499 = vst [vmem:[%s167 + $0x58] sm:$0xff] %v436
        %500 = vst [vmem:[%s167 + $0x60] sm:$0xff] %v440
        %501 = vst [vmem:[%s167 + $0x68] sm:$0xff] %v442
        %502 = vst [vmem:[%s167 + $0x70] sm:$0xff] %v444
        %503 = vst [vmem:[%s167 + $0x78] sm:$0xff] %v446
        %504 = vst [vmem:[%s167 + $0x80] sm:$0xff] %v450
        %505 = vst [vmem:[%s167 + $0x88] sm:$0xff] %v452
        %506 = vst [vmem:[%s167 + $0x90] sm:$0xff] %v454
        %507 = vst [vmem:[%s167 + $0x98] sm:$0xff] %v456
        %508 = vst [vmem:[%s167 + $0xa0] sm:$0xff] %v460
        %509 = vst [vmem:[%s167 + $0xa8] sm:$0xff] %v462
        %510 = vst [vmem:[%s167 + $0xb0] sm:$0xff] %v464
        %511 = vst [vmem:[%s167 + $0xb8] sm:$0xff] %v466
        %512 = vst [vmem:[%s167 + $0xc0] sm:$0xff] %v470
        %513 = vst [vmem:[%s167 + $0xc8] sm:$0xff] %v472
        %514 = vst [vmem:[%s167 + $0xd0] sm:$0xff] %v474
        %515 = vst [vmem:[%s167 + $0xd8] sm:$0xff] %v476
        %516 = vst [vmem:[%s167 + $0xe0] sm:$0xff] %v480
        %517 = vst [vmem:[%s167 + $0xe8] sm:$0xff] %v482
        %518 = vst [vmem:[%s167 + $0xf0] sm:$0xff] %v484
        %519 = vst [vmem:[%s167 + $0xf8] sm:$0xff] %v486
        %s520 = sand.u32 %s90, 1
        %s521 = scalar_lea.sflag [#allocation3], %s520
        %s522 = sand.u32 %s90, 1
        %s523 = smul.addr %s522, 256
        %s524 = scalar_lea.vmem [#allocation2], %s523
        // Predicated region
        $region29: #{custom_transformer_forward.1} parent=27 // pred_check
          %p525 = pneg %p100
        $region30: #{custom_transformer_forward.1} parent=27 // pred_check_branch
          %527 = sbr.rel (%p525) target = $region32
        $region31: #{custom_transformer_forward.1} parent=27 // pred_region
          %s528 = smul.u32 16, %s20
          %s529 = smul.u32 2, %s21
          %s531 = ssub.s32 4096, 4096
          %532 = vsyncadd %s521, %s531
          %s533 = smul.addr %s528, 2
          %s534 = sadd.s32 %s529, %s533
          %s535 = smul.addr %s534, 128
          %s536 = scalar_lea.hbm %s2, %s535
          %s537 = sshll.u32 %s524, 4
          %s538 = int_to_ptr.vmem [resolvable:$true] %s537
          %543 = dma.vmem_to_hbm [thread:$0]  %s538, 4096, %s536, %s521, 256, 256, 16
        $region32: #{custom_transformer_forward.1} parent=27 // pred_fallthru
          _
      $region28: #{custom_transformer_forward.1} parent=5 // pred_fallthru
        _
      %p544 = scmp.le.s32.totalorder 2, %s11
      // Predicated region
      $region33: #{custom_transformer_forward.1} parent=5 // pred_check
        %p545 = pneg %p544
      $region34: #{custom_transformer_forward.1} parent=5 // pred_check_branch
        %547 = sbr.rel (%p545) target = $region36
      $region35: #{custom_transformer_forward.1} parent=5 // pred_region
        %s548 = ssub.s32 %s11, 2
        // Predicated region
        $region37: #{custom_transformer_forward.1} parent=35 // pred_check
          %p549 = pneg %p106
        $region38: #{custom_transformer_forward.1} parent=35 // pred_check_branch
          %551 = sbr.rel (%p549) target = $region40
        $region39: #{custom_transformer_forward.1} parent=35 // pred_region
          %s552 = sand.u32 %s91, 1
          %s553 = scalar_lea.sflag [#allocation3], %s552
          %s554 = sand.u32 %s91, 1
          %s555 = smul.addr %s554, 256
          %s556 = scalar_lea.vmem [#allocation2], %s555
          %557 = dma.done %s553, 4096
        $region40: #{custom_transformer_forward.1} parent=35 // pred_fallthru
          _
      $region36: #{custom_transformer_forward.1} parent=5 // pred_fallthru
        _
    $region6: #{custom_transformer_forward.1} parent=1 // loop_footer
      %s15 = sadd.s32 1, %s11
    $region7: #{custom_transformer_forward.1} parent=1 // loop_footer_branch
      %10 = sbr.rel target = $region3
    $region8: #{custom_transformer_forward.1} parent=1 // loop_exit
      _
    %558 = vsyncpa [#allocation3], 1
    %s559 = scalar_lea.sflag [#allocation3], 1
    %560 = vsyncpa %s559, 1

</llo_original>
